<compile_context>
chip_gen: v7x
topology: tpu7x:2x2x1
jax: 0.10.0
libtpu: 0.0.40
codegen_flags: <defaults>
</compile_context>

<pallas_src>
import jax
import jax.numpy as jnp
from jax import lax
from jax.experimental import pallas as pl
from jax.experimental.pallas import tpu as pltpu


# ---- MLPConfig (matches the PyTorch module's config) ------------------------
class MLPConfig:
    EMBEDDING_DIM = 32
    HIDDEN_DIM = 32
    NUM_CLASSES = 4


LANE = 128        # lane-dense padding target for feature / class dims
NEG_BIG = -1e30   # bias on padded class columns -> exp() underflows to 0


def _round_up(x, m):
    return ((x + m - 1) // m) * m


# ---- Pallas kernel ----------------------------------------------------------
def mlp_kernel(tok_ref, emb_ref, w1_ref, b1_ref, w2_ref, b2_ref, out_ref):
    """One grid step processes one (TB,)-row batch tile.

    tok_ref : (TB, S)    int32  VMEM  token ids for this batch tile
    emb_ref : (Vp, Ep)   bf16   VMEM-resident embedding table (zero padded)
    w1_ref  : (Ep, Hp)   bf16   first linear, already scaled by 1/S
    b1_ref  : (1, Hp)    f32    (padded cols = 0)
    w2_ref  : (Hp, 128)  bf16   class dim zero-padded to 128 lanes
    b2_ref  : (1, 128)   f32    padded class cols = -1e30
    out_ref : (TB, 128)  f32    log-probs (padded cols discarded by wrapper)
    """
    TB, S = tok_ref.shape
    Vp = emb_ref.shape[0]

    # ---- token counts per vocab entry (replaces the embedding gather) -------
    tok = tok_ref[...]                                          # (TB, S) int32
    vocab_iota = lax.broadcasted_iota(jnp.int32, (1, 1, Vp), 2)
    onehot = (tok[:, :, None] == vocab_iota)                    # (TB, S, Vp)
    counts = jnp.sum(onehot.astype(jnp.float32), axis=1)        # (TB, Vp)

    # ---- sum of embeddings as one MXU matmul (1/S folded into W1) -----------
    x = jnp.dot(counts.astype(jnp.bfloat16), emb_ref[...],
                preferred_element_type=jnp.float32)             # (TB, Ep) f32

    # ---- hidden = ReLU(mean_emb @ W1 + b1) -----------------------------------
    h = jnp.dot(x.astype(jnp.bfloat16), w1_ref[...],
                preferred_element_type=jnp.float32) + b1_ref[...]
    h = jnp.maximum(h, 0.0)                                     # (TB, Hp) f32

    # ---- logits over 128 lane-padded classes ---------------------------------
    logits = jnp.dot(h.astype(jnp.bfloat16), w2_ref[...],
                     preferred_element_type=jnp.float32) + b2_ref[...]

    # ---- log_softmax (padded class columns contribute exp -> 0) --------------
    m = jnp.max(logits, axis=1, keepdims=True)
    shifted = logits - m
    lse = jnp.log(jnp.sum(jnp.exp(shifted), axis=1, keepdims=True))
    out_ref[...] = shifted - lse


# ---- Host wrapper ------------------------------------------------------------
def mlp_forward(token_ids, params, *, batch_tile=128):
    """token_ids: (B, S) int32. Returns (B, NUM_CLASSES) float32 log-probs."""
    emb_table = params["embedding"]                   # (V, E) f32
    w1, b1 = params["w1"], params["b1"]               # (E, H), (H,)
    w2, b2 = params["w2"], params["b2"]               # (H, C), (C,)

    B, S = token_ids.shape
    V, E = emb_table.shape
    H = w1.shape[1]
    C = w2.shape[1]

    # Batch tile: >=8 sublanes, capped at batch_tile (128 here; use 256 on
    # v6e/v7x for large batches), but never padded far past the real batch.
    TB = max(8, min(batch_tile, _round_up(B, 8)))
    num_bt = pl.cdiv(B, TB)
    B_pad = num_bt * TB

    Vp = _round_up(V, LANE)
    Ep = _round_up(E, LANE)
    Hp = _round_up(H, LANE)

    # Pad token ids along batch with token 0; padded rows are discarded below.
    tok_p = jnp.zeros((B_pad, S), jnp.int32).at[:B].set(token_ids.astype(jnp.int32))

    # Zero-padded, lane-dense parameters (bf16 for MXU, f32 biases).
    emb_k = jnp.zeros((Vp, Ep), jnp.bfloat16).at[:V, :E].set(
        emb_table.astype(jnp.bfloat16))
    w1_k = jnp.zeros((Ep, Hp), jnp.bfloat16).at[:E, :H].set(
        (w1 / S).astype(jnp.bfloat16))                # 1/S of the mean folded in
    b1_k = jnp.zeros((1, Hp), jnp.float32).at[0, :H].set(b1.astype(jnp.float32))
    w2_k = jnp.zeros((Hp, LANE), jnp.bfloat16).at[:H, :C].set(
        w2.astype(jnp.bfloat16))
    b2_k = jnp.full((1, LANE), NEG_BIG, jnp.float32).at[0, :C].set(
        b2.astype(jnp.float32))

    grid_spec = pltpu.PrefetchScalarGridSpec(
        num_scalar_prefetch=0,
        grid=(num_bt,),                                  # one step per batch tile
        in_specs=[
            pl.BlockSpec((TB, S), lambda i: (i, 0)),         # token ids per tile
            pl.BlockSpec((Vp, Ep), lambda i: (0, 0)),        # VMEM-resident table
            pl.BlockSpec((Ep, Hp), lambda i: (0, 0)),        # resident weights
            pl.BlockSpec((1, Hp), lambda i: (0, 0)),
            pl.BlockSpec((Hp, LANE), lambda i: (0, 0)),
            pl.BlockSpec((1, LANE), lambda i: (0, 0)),
        ],
        out_specs=pl.BlockSpec((TB, LANE), lambda i: (i, 0)),
    )

    out = pl.pallas_call(
        mlp_kernel,
        out_shape=jax.ShapeDtypeStruct((B_pad, LANE), jnp.float32),
        grid_spec=grid_spec,
        compiler_params=pltpu.CompilerParams(
            dimension_semantics=("parallel",),   # batch tiles shard across TCs
        ),
    )(tok_p, emb_k, w1_k, b1_k, w2_k, b2_k)

    # Strip batch padding and the lane padding of the class dimension.
    return out[:B, :C]


# ---- Pure-JAX reference (matches the PyTorch forward) ------------------------
def mlp_reference(token_ids, params):
    emb = jnp.take(params["embedding"], token_ids, axis=0)   # (B, S, E)
    x = jnp.mean(emb, axis=1)                                # (B, E)
    h = jax.nn.relu(x @ params["w1"] + params["b1"])
    logits = h @ params["w2"] + params["b2"]
    return jax.nn.log_softmax(logits, axis=1)


# ---- Deterministic parameter init -------------------------------------------
def init_params(key, vocab_size):
    E, H, C = MLPConfig.EMBEDDING_DIM, MLPConfig.HIDDEN_DIM, MLPConfig.NUM_CLASSES
    k_emb, k_w1, k_b1, k_w2, k_b2 = jax.random.split(key, 5)
    # PyTorch nn.Linear weights are (out, in); we store them transposed (in, out).
    return {
        "embedding": jax.random.normal(k_emb, (vocab_size, E), jnp.float32),
        "w1": jax.random.normal(k_w1, (E, H), jnp.float32) * 0.1,
        "b1": jax.random.normal(k_b1, (H,), jnp.float32) * 0.1,
        "w2": jax.random.normal(k_w2, (H, C), jnp.float32) * 0.1,
        "b2": jax.random.normal(k_b2, (C,), jnp.float32) * 0.1,
    }


if __name__ == "__main__":
    key = jax.random.PRNGKey(0)
    vocab_size = 100
    B, S = 2, 8

    k_params, k_tokens = jax.random.split(key)
    params = init_params(k_params, vocab_size)
    token_ids = jax.random.randint(k_tokens, (B, S), 0, vocab_size, jnp.int32)

    out = jax.block_until_ready(mlp_forward(token_ids, params))

    assert out.shape == (B, MLPConfig.NUM_CLASSES)

    # Rows of exp(log_softmax) sum to ~1.
    row_sums = jnp.sum(jnp.exp(out), axis=1)
    assert bool(jnp.all(jnp.abs(row_sums - 1.0) < 1e-4))

    # Matches the f32 reference up to bf16 matmul rounding.
    ref = mlp_reference(token_ids, params)
    assert bool(jnp.max(jnp.abs(out - ref)) < 5e-2)

    print("KERNEL_OK")
</pallas_src>

<mosaic_0001>
module attributes {stable_mosaic.version = 11 : i64} {
  func.func @mlp_kernel(%arg0: i32, %arg1: memref<8x8xi32, #tpu.memory_space<vmem>>, %arg2: memref<128x128xbf16, #tpu.memory_space<vmem>>, %arg3: memref<128x128xbf16, #tpu.memory_space<vmem>>, %arg4: memref<1x128xf32, #tpu.memory_space<vmem>>, %arg5: memref<128x128xbf16, #tpu.memory_space<vmem>>, %arg6: memref<1x128xf32, #tpu.memory_space<vmem>>, %arg7: memref<8x128xf32, #tpu.memory_space<vmem>>) attributes {dimension_semantics = [#tpu.dimension_semantics<parallel>], iteration_bounds = array<i64: 1>, scalar_prefetch = 0 : i64, scratch_operands = 0 : i64, tpu.core_type = #tpu.core_type<tc>, window_params = [{transform_indices = @transform_0, window_bounds = array<i64: 8, 8>}, {pipeline_mode = #tpu.pipeline_mode<synchronous>, transform_indices = @transform_1, window_bounds = array<i64: 128, 128>}, {pipeline_mode = #tpu.pipeline_mode<synchronous>, transform_indices = @transform_2, window_bounds = array<i64: 128, 128>}, {pipeline_mode = #tpu.pipeline_mode<synchronous>, transform_indices = @transform_3, window_bounds = array<i64: 1, 128>}, {pipeline_mode = #tpu.pipeline_mode<synchronous>, transform_indices = @transform_4, window_bounds = array<i64: 128, 128>}, {pipeline_mode = #tpu.pipeline_mode<synchronous>, transform_indices = @transform_5, window_bounds = array<i64: 1, 128>}, {transform_indices = @transform_6, window_bounds = array<i64: 8, 128>}]} {
    %c0 = arith.constant 0 : index
    %c0_0 = arith.constant 0 : index
    %0 = vector.load %arg1[%c0, %c0_0] : memref<8x8xi32, #tpu.memory_space<vmem>>, vector<8x8xi32>
    %1 = tpu.iota {dimensions = array<i32: 2>} : vector<1x1x128xi32>
    %2 = vector.shape_cast %0 : vector<8x8xi32> to vector<8x8x1xi32>
    %3 = vector.broadcast %2 : vector<8x8x1xi32> to vector<8x8x128xi32>
    %4 = vector.broadcast %1 : vector<1x1x128xi32> to vector<8x8x128xi32>
    %5 = arith.cmpi eq, %3, %4 : vector<8x8x128xi32>
    %6 = arith.extui %5 : vector<8x8x128xi1> to vector<8x8x128xi32>
    %7 = arith.sitofp %6 : vector<8x8x128xi32> to vector<8x8x128xf32>
    %cst = arith.constant dense<0.000000e+00> : vector<8x128xf32>
    %8 = vector.multi_reduction <add>, %7, %cst [1] : vector<8x8x128xf32> to vector<8x128xf32>
    %9 = arith.truncf %8 : vector<8x128xf32> to vector<8x128xbf16>
    %c0_1 = arith.constant 0 : index
    %c0_2 = arith.constant 0 : index
    %10 = vector.load %arg2[%c0_1, %c0_2] : memref<128x128xbf16, #tpu.memory_space<vmem>>, vector<128x128xbf16>
    %cst_3 = arith.constant dense<0.000000e+00> : vector<8x128xf32>
    %11 = tpu.matmul %9, %10, %cst_3 {dimension_numbers = #tpu.dot_dimension_numbers<[1], [0], [0], [1], [0, 0, 1, 1], [], []>} : vector<8x128xbf16>, vector<128x128xbf16>, vector<8x128xf32> -> vector<8x128xf32>
    %12 = arith.truncf %11 : vector<8x128xf32> to vector<8x128xbf16>
    %c0_4 = arith.constant 0 : index
    %c0_5 = arith.constant 0 : index
    %13 = vector.load %arg3[%c0_4, %c0_5] : memref<128x128xbf16, #tpu.memory_space<vmem>>, vector<128x128xbf16>
    %cst_6 = arith.constant dense<0.000000e+00> : vector<8x128xf32>
    %14 = tpu.matmul %12, %13, %cst_6 {dimension_numbers = #tpu.dot_dimension_numbers<[1], [0], [0], [1], [0, 0, 1, 1], [], []>} : vector<8x128xbf16>, vector<128x128xbf16>, vector<8x128xf32> -> vector<8x128xf32>
    %c0_7 = arith.constant 0 : index
    %c0_8 = arith.constant 0 : index
    %15 = vector.load %arg4[%c0_7, %c0_8] : memref<1x128xf32, #tpu.memory_space<vmem>>, vector<1x128xf32>
    %16 = vector.broadcast %15 : vector<1x128xf32> to vector<8x128xf32>
    %17 = arith.addf %14, %16 : vector<8x128xf32>
    %cst_9 = arith.constant 0.000000e+00 : f32
    %18 = vector.broadcast %cst_9 : f32 to vector<8x128xf32>
    %19 = arith.maximumf %17, %18 : vector<8x128xf32>
    %20 = arith.truncf %19 : vector<8x128xf32> to vector<8x128xbf16>
    %c0_10 = arith.constant 0 : index
    %c0_11 = arith.constant 0 : index
    %21 = vector.load %arg5[%c0_10, %c0_11] : memref<128x128xbf16, #tpu.memory_space<vmem>>, vector<128x128xbf16>
    %cst_12 = arith.constant dense<0.000000e+00> : vector<8x128xf32>
    %22 = tpu.matmul %20, %21, %cst_12 {dimension_numbers = #tpu.dot_dimension_numbers<[1], [0], [0], [1], [0, 0, 1, 1], [], []>} : vector<8x128xbf16>, vector<128x128xbf16>, vector<8x128xf32> -> vector<8x128xf32>
    %c0_13 = arith.constant 0 : index
    %c0_14 = arith.constant 0 : index
    %23 = vector.load %arg6[%c0_13, %c0_14] : memref<1x128xf32, #tpu.memory_space<vmem>>, vector<1x128xf32>
    %24 = vector.broadcast %23 : vector<1x128xf32> to vector<8x128xf32>
    %25 = arith.addf %22, %24 : vector<8x128xf32>
    %cst_15 = arith.constant dense<0xFF800000> : vector<8xf32>
    %26 = vector.multi_reduction <maximumf>, %25, %cst_15 [1] : vector<8x128xf32> to vector<8xf32>
    %27 = vector.shape_cast %26 : vector<8xf32> to vector<8x1xf32>
    %28 = vector.broadcast %27 : vector<8x1xf32> to vector<8x128xf32>
    %29 = arith.subf %25, %28 : vector<8x128xf32>
    %30 = math.exp %29 : vector<8x128xf32>
    %cst_16 = arith.constant dense<0.000000e+00> : vector<8xf32>
    %31 = vector.multi_reduction <add>, %30, %cst_16 [1] : vector<8x128xf32> to vector<8xf32>
    %32 = vector.shape_cast %31 : vector<8xf32> to vector<8x1xf32>
    %33 = math.log %32 : vector<8x1xf32>
    %34 = vector.broadcast %33 : vector<8x1xf32> to vector<8x128xf32>
    %35 = arith.subf %29, %34 : vector<8x128xf32>
    %c0_17 = arith.constant 0 : index
    %c0_18 = arith.constant 0 : index
    %36 = vector.load %arg7[%c0_17, %c0_18] : memref<8x128xf32, #tpu.memory_space<vmem>>, vector<8x128xf32>
    tpu.vector_store %arg7[%c0_17, %c0_18], %35 {strides = array<i32>} : memref<8x128xf32, #tpu.memory_space<vmem>>, vector<8x128xf32>,
    return
  }
  func.func @transform_0(%arg0: i32) -> (i32, i32) {
    %c0_i32 = arith.constant 0 : i32
    %c0_i32_0 = arith.constant 0 : i32
    return %arg0, %c0_i32 : i32, i32
  }
  func.func @transform_1(%arg0: i32) -> (i32, i32) {
    %c0_i32 = arith.constant 0 : i32
    %c0_i32_0 = arith.constant 0 : i32
    %c0_i32_1 = arith.constant 0 : i32
    return %c0_i32, %c0_i32_0 : i32, i32
  }
  func.func @transform_2(%arg0: i32) -> (i32, i32) {
    %c0_i32 = arith.constant 0 : i32
    %c0_i32_0 = arith.constant 0 : i32
    %c0_i32_1 = arith.constant 0 : i32
    return %c0_i32, %c0_i32_0 : i32, i32
  }
  func.func @transform_3(%arg0: i32) -> (i32, i32) {
    %c0_i32 = arith.constant 0 : i32
    %c0_i32_0 = arith.constant 0 : i32
    %c0_i32_1 = arith.constant 0 : i32
    return %c0_i32, %c0_i32_0 : i32, i32
  }
  func.func @transform_4(%arg0: i32) -> (i32, i32) {
    %c0_i32 = arith.constant 0 : i32
    %c0_i32_0 = arith.constant 0 : i32
    %c0_i32_1 = arith.constant 0 : i32
    return %c0_i32, %c0_i32_0 : i32, i32
  }
  func.func @transform_5(%arg0: i32) -> (i32, i32) {
    %c0_i32 = arith.constant 0 : i32
    %c0_i32_0 = arith.constant 0 : i32
    %c0_i32_1 = arith.constant 0 : i32
    return %c0_i32, %c0_i32_0 : i32, i32
  }
  func.func @transform_6(%arg0: i32) -> (i32, i32) {
    %c0_i32 = arith.constant 0 : i32
    %c0_i32_0 = arith.constant 0 : i32
    return %arg0, %c0_i32 : i32, i32
  }
}

</mosaic_0001>

<llo_original>
// kernel: tpu_custom_call.1
$region0: #{tpu_custom_call.1}
  #allocation0 [shape = 'u32[]', space=smem, size = 0x4, offset = 0x4, fixed_abs, tag = 'smem constant byte address 0x4 - core index']
  #allocation1 [shape = 'u32[144,128]{1,0:T(1,128)}', space=vmem, size = 0x12000, scoped, tag = 'internal scratch']
  %s0 = inlined_call_operand.hbm [shape: s32[8,8], index: 0, kind: input, shape index: {}]
  %s1 = inlined_call_operand.hbm [shape: bf16[128,128], index: 1, kind: input, shape index: {}]
  %s2 = inlined_call_operand.hbm [shape: bf16[128,128], index: 2, kind: input, shape index: {}]
  %s3 = inlined_call_operand.vmem [shape: f32[1,128], index: 3, kind: input, shape index: {}]
  %s4 = inlined_call_operand.hbm [shape: bf16[128,128], index: 4, kind: input, shape index: {}]
  %s5 = inlined_call_operand.vmem [shape: f32[1,128], index: 5, kind: input, shape index: {}]
  %s6 = inlined_call_operand.hbm [shape: f32[8,128], index: 6, kind: output, shape index: {}]
  %s7 = sld [smem:[#allocation0]]
  $region50: #{tpu_custom_call.1} parent=0
    _
  %s9 = ssub.s32 1, %s7
  %s10 = scalar_select 0, %s9, %s7
  $region1: #{tpu_custom_call.1} parent=0
    #allocation2 [shape = 'u8[4096]{0}', space=vmem, size = 0x1000, scoped, tag = 'input window, operand 0, single buffered']
    #allocation3 [shape = 's32[1]{0}', space=sflag, size = 0x4, scoped, tag = 'scoped memory for tpu_custom_call.1']
    #allocation4 [shape = 's32[1]{0}', space=sflag, size = 0x4, scoped, tag = 'scoped memory for tpu_custom_call.1']
    #allocation5 [shape = 'u8[32768]{0}', space=vmem, size = 0x8000, scoped, tag = 'input window, operand 1, single buffered']
    #allocation6 [shape = 's32[1]{0}', space=sflag, size = 0x4, scoped, tag = 'scoped memory for tpu_custom_call.1']
    #allocation7 [shape = 'u8[32768]{0}', space=vmem, size = 0x8000, scoped, tag = 'input window, operand 2, single buffered']
    #allocation8 [shape = 'u8[32768]{0}', space=vmem, size = 0x8000, scoped, tag = 'input window, operand 4, single buffered']
    #allocation9 [shape = 's32[1]{0}', space=sflag, size = 0x4, scoped, tag = 'scoped memory for tpu_custom_call.1']
    #allocation10 [shape = 'u8[4096]{0}', space=vmem, size = 0x1000, scoped, tag = 'output window, operand 0, single buffered']
    %11 = vsyncpa [#allocation3], 0
    %12 = vsyncpa [#allocation6], 0
    %13 = vsyncpa [#allocation9], 0
    %14 = vsyncpa [#allocation4], 0
    // Predicated region
    $region2: #{tpu_custom_call.1} parent=1 // pred_check
      _
    $region3: #{tpu_custom_call.1} parent=1 // pred_check_branch
      %16 = sbr.rel (0) target = $region5
    $region4: #{tpu_custom_call.1} parent=1 // pred_region
      %s18 = ssub.s32 128, 128
      %19 = vsyncadd [#allocation3], %s18
      %s21 = sshll.u32 [#allocation2], 4
      %s22 = int_to_ptr.vmem [resolvable:$true] %s21
      %24 = dma.hbm_to_vmem [thread:$0]  %s0, 128, %s22, [#allocation3]
    $region5: #{tpu_custom_call.1} parent=1 // pred_fallthru
      _
    // Predicated region
    $region6: #{tpu_custom_call.1} parent=1 // pred_check
      _
    $region7: #{tpu_custom_call.1} parent=1 // pred_check_branch
      %26 = sbr.rel (0) target = $region9
    $region8: #{tpu_custom_call.1} parent=1 // pred_region
      %s28 = ssub.s32 1024, 1024
      %29 = vsyncadd [#allocation6], %s28
      %s30 = sshll.u32 [#allocation5], 4
      %s31 = int_to_ptr.vmem [resolvable:$true] %s30
      %36 = dma.hbm_to_vmem [thread:$0]  %s1, 1024, %s31, [#allocation6], 64, 64, 4
    $region9: #{tpu_custom_call.1} parent=1 // pred_fallthru
      _
    // Predicated region
    $region10: #{tpu_custom_call.1} parent=1 // pred_check
      _
    $region11: #{tpu_custom_call.1} parent=1 // pred_check_branch
      %38 = sbr.rel (0) target = $region13
    $region12: #{tpu_custom_call.1} parent=1 // pred_region
      %s40 = ssub.s32 1024, 1024
      %41 = vsyncadd [#allocation6], %s40
      %s42 = sshll.u32 [#allocation7], 4
      %s43 = int_to_ptr.vmem [resolvable:$true] %s42
      %48 = dma.hbm_to_vmem [thread:$0]  %s2, 1024, %s43, [#allocation6], 64, 64, 4
    $region13: #{tpu_custom_call.1} parent=1 // pred_fallthru
      _
    // Predicated region
    $region14: #{tpu_custom_call.1} parent=1 // pred_check
      _
    $region15: #{tpu_custom_call.1} parent=1 // pred_check_branch
      %50 = sbr.rel (0) target = $region17
    $region16: #{tpu_custom_call.1} parent=1 // pred_region
      _
    $region17: #{tpu_custom_call.1} parent=1 // pred_fallthru
      _
    // Predicated region
    $region18: #{tpu_custom_call.1} parent=1 // pred_check
      _
    $region19: #{tpu_custom_call.1} parent=1 // pred_check_branch
      %52 = sbr.rel (0) target = $region21
    $region20: #{tpu_custom_call.1} parent=1 // pred_region
      %s54 = ssub.s32 1024, 1024
      %55 = vsyncadd [#allocation9], %s54
      %s56 = sshll.u32 [#allocation8], 4
      %s57 = int_to_ptr.vmem [resolvable:$true] %s56
      %62 = dma.hbm_to_vmem [thread:$0]  %s4, 1024, %s57, [#allocation9], 64, 64, 4
    $region21: #{tpu_custom_call.1} parent=1 // pred_fallthru
      _
    // Predicated region
    $region22: #{tpu_custom_call.1} parent=1 // pred_check
      _
    $region23: #{tpu_custom_call.1} parent=1 // pred_check_branch
      %64 = sbr.rel (0) target = $region25
    $region24: #{tpu_custom_call.1} parent=1 // pred_region
      _
    $region25: #{tpu_custom_call.1} parent=1 // pred_fallthru
      _
    // Predicated region
    $region26: #{tpu_custom_call.1} parent=1 // pred_check
      _
    $region27: #{tpu_custom_call.1} parent=1 // pred_check_branch
      %66 = sbr.rel (0) target = $region29
    $region28: #{tpu_custom_call.1} parent=1 // pred_region
      %67 = dma.done [#allocation3], 128
    $region29: #{tpu_custom_call.1} parent=1 // pred_fallthru
      _
    // Predicated region
    $region30: #{tpu_custom_call.1} parent=1 // pred_check
      _
    $region31: #{tpu_custom_call.1} parent=1 // pred_check_branch
      %69 = sbr.rel (0) target = $region33
    $region32: #{tpu_custom_call.1} parent=1 // pred_region
      %70 = dma.done [#allocation6], 1024
    $region33: #{tpu_custom_call.1} parent=1 // pred_fallthru
      _
    // Predicated region
    $region34: #{tpu_custom_call.1} parent=1 // pred_check
      _
    $region35: #{tpu_custom_call.1} parent=1 // pred_check_branch
      %72 = sbr.rel (0) target = $region37
    $region36: #{tpu_custom_call.1} parent=1 // pred_region
      %73 = dma.done [#allocation6], 1024
    $region37: #{tpu_custom_call.1} parent=1 // pred_fallthru
      _
    // Predicated region
    $region38: #{tpu_custom_call.1} parent=1 // pred_check
      _
    $region39: #{tpu_custom_call.1} parent=1 // pred_check_branch
      %75 = sbr.rel (0) target = $region41
    $region40: #{tpu_custom_call.1} parent=1 // pred_region
      %76 = dma.done [#allocation9], 1024
    $region41: #{tpu_custom_call.1} parent=1 // pred_fallthru
      _
    %v78 = vld [vmem:[#allocation2] sm:$0xff]
    %v79 = vlaneseq
    %v80 = vand.u32 %v79, 127
    %v81 = vlaneseq
    %v82 = vshrl.u32 %v81, 7
    %v83 = vsub.s32 0, %v82
    %v84 = vrot.slane %v78, %v83
    %86 = vbcast.lane.b32.xlu0 %v84, 256
    %v87 = vpop.permute.xlu0 %86
    %v88 = vlaneseq
    %v89 = vshrl.u32 %v88, 7
    %v90 = vsub.s32 1, %v89
    %v91 = vrot.slane %v78, %v90
    %93 = vbcast.lane.b32.xlu0 %v91, 256
    %v94 = vpop.permute.xlu0 %93
    %v95 = vlaneseq
    %v96 = vshrl.u32 %v95, 7
    %v97 = vsub.s32 2, %v96
    %v98 = vrot.slane %v78, %v97
    %100 = vbcast.lane.b32.xlu0 %v98, 256
    %v101 = vpop.permute.xlu0 %100
    %v102 = vlaneseq
    %v103 = vshrl.u32 %v102, 7
    %v104 = vsub.s32 3, %v103
    %v105 = vrot.slane %v78, %v104
    %107 = vbcast.lane.b32.xlu0 %v105, 256
    %v108 = vpop.permute.xlu0 %107
    %v109 = vlaneseq
    %v110 = vshrl.u32 %v109, 7
    %v111 = vsub.s32 4, %v110
    %v112 = vrot.slane %v78, %v111
    %114 = vbcast.lane.b32.xlu0 %v112, 256
    %v115 = vpop.permute.xlu0 %114
    %v116 = vlaneseq
    %v117 = vshrl.u32 %v116, 7
    %v118 = vsub.s32 5, %v117
    %v119 = vrot.slane %v78, %v118
    %121 = vbcast.lane.b32.xlu0 %v119, 256
    %v122 = vpop.permute.xlu0 %121
    %v123 = vlaneseq
    %v124 = vshrl.u32 %v123, 7
    %v125 = vsub.s32 6, %v124
    %v126 = vrot.slane %v78, %v125
    %128 = vbcast.lane.b32.xlu0 %v126, 256
    %v129 = vpop.permute.xlu0 %128
    %v130 = vlaneseq
    %v131 = vshrl.u32 %v130, 7
    %v132 = vsub.s32 7, %v131
    %v133 = vrot.slane %v78, %v132
    %135 = vbcast.lane.b32.xlu0 %v133, 256
    %v136 = vpop.permute.xlu0 %135
    %vm137 = vcmp.eq.s32.totalorder %v87, %v80
    %vm138 = vcmp.eq.s32.totalorder %v94, %v80
    %vm139 = vcmp.eq.s32.totalorder %v101, %v80
    %vm140 = vcmp.eq.s32.totalorder %v108, %v80
    %vm141 = vcmp.eq.s32.totalorder %v115, %v80
    %vm142 = vcmp.eq.s32.totalorder %v122, %v80
    %vm143 = vcmp.eq.s32.totalorder %v129, %v80
    %vm144 = vcmp.eq.s32.totalorder %v136, %v80
    %v145 = vsel %vm137, 1, 0
    %v146 = vsel %vm138, 1, 0
    %v147 = vsel %vm139, 1, 0
    %v148 = vsel %vm140, 1, 0
    %v149 = vsel %vm141, 1, 0
    %v150 = vsel %vm142, 1, 0
    %v151 = vsel %vm143, 1, 0
    %v152 = vsel %vm144, 1, 0
    %v153 = vcvt.s32.f32 %v145
    %v154 = vcvt.s32.f32 %v146
    %v155 = vcvt.s32.f32 %v147
    %v156 = vcvt.s32.f32 %v148
    %v157 = vcvt.s32.f32 %v149
    %v158 = vcvt.s32.f32 %v150
    %v159 = vcvt.s32.f32 %v151
    %v160 = vcvt.s32.f32 %v152
    %v161 = vrot.slane %v153, 4
    %v162 = vadd.f32 %v153, %v161
    %v163 = vrot.slane %v162, 2
    %v164 = vadd.f32 %v162, %v163
    %v165 = vrot.slane %v164, 1
    %v166 = vadd.f32 %v164, %v165
    %v167 = vrot.slane %v154, 4
    %v168 = vadd.f32 %v154, %v167
    %v169 = vrot.slane %v168, 2
    %v170 = vadd.f32 %v168, %v169
    %v171 = vrot.slane %v170, 1
    %v172 = vadd.f32 %v170, %v171
    %v173 = vrot.slane %v155, 4
    %v174 = vadd.f32 %v155, %v173
    %v175 = vrot.slane %v174, 2
    %v176 = vadd.f32 %v174, %v175
    %v177 = vrot.slane %v176, 1
    %v178 = vadd.f32 %v176, %v177
    %v179 = vrot.slane %v156, 4
    %v180 = vadd.f32 %v156, %v179
    %v181 = vrot.slane %v180, 2
    %v182 = vadd.f32 %v180, %v181
    %v183 = vrot.slane %v182, 1
    %v184 = vadd.f32 %v182, %v183
    %v185 = vrot.slane %v157, 4
    %v186 = vadd.f32 %v157, %v185
    %v187 = vrot.slane %v186, 2
    %v188 = vadd.f32 %v186, %v187
    %v189 = vrot.slane %v188, 1
    %v190 = vadd.f32 %v188, %v189
    %v191 = vrot.slane %v158, 4
    %v192 = vadd.f32 %v158, %v191
    %v193 = vrot.slane %v192, 2
    %v194 = vadd.f32 %v192, %v193
    %v195 = vrot.slane %v194, 1
    %v196 = vadd.f32 %v194, %v195
    %v197 = vrot.slane %v159, 4
    %v198 = vadd.f32 %v159, %v197
    %v199 = vrot.slane %v198, 2
    %v200 = vadd.f32 %v198, %v199
    %v201 = vrot.slane %v200, 1
    %v202 = vadd.f32 %v200, %v201
    %v203 = vrot.slane %v160, 4
    %v204 = vadd.f32 %v160, %v203
    %v205 = vrot.slane %v204, 2
    %v206 = vadd.f32 %v204, %v205
    %v207 = vrot.slane %v206, 1
    %v208 = vadd.f32 %v206, %v207
    %v209 = vpack.c.bf16 %v166, %v166
    %v210 = vpack.c.bf16 %v172, %v172
    %v211 = vpack.c.bf16 %v178, %v178
    %v212 = vpack.c.bf16 %v184, %v184
    %v213 = vpack.c.bf16 %v190, %v190
    %v214 = vpack.c.bf16 %v196, %v196
    %v215 = vpack.c.bf16 %v202, %v202
    %v216 = vpack.c.bf16 %v208, %v208
    %v217 = vld [vmem:[#allocation5] sm:$0xf]
    %v218 = vld [vmem:[#allocation5 + $0x4] sm:$0xf]
    %v219 = vld [vmem:[#allocation5 + $0x8] sm:$0xf]
    %v220 = vld [vmem:[#allocation5 + $0xc] sm:$0xf]
    %v221 = vld [vmem:[#allocation5 + $0x10] sm:$0xf]
    %v222 = vld [vmem:[#allocation5 + $0x14] sm:$0xf]
    %v223 = vld [vmem:[#allocation5 + $0x18] sm:$0xf]
    %v224 = vld [vmem:[#allocation5 + $0x1c] sm:$0xf]
    %v225 = vld [vmem:[#allocation5 + $0x20] sm:$0xf]
    %v226 = vld [vmem:[#allocation5 + $0x24] sm:$0xf]
    %v227 = vld [vmem:[#allocation5 + $0x28] sm:$0xf]
    %v228 = vld [vmem:[#allocation5 + $0x2c] sm:$0xf]
    %v229 = vld [vmem:[#allocation5 + $0x30] sm:$0xf]
    %v230 = vld [vmem:[#allocation5 + $0x34] sm:$0xf]
    %v231 = vld [vmem:[#allocation5 + $0x38] sm:$0xf]
    %v232 = vld [vmem:[#allocation5 + $0x3c] sm:$0xf]
    %v241 = vunpack.c.l.b16 %v209
    %v242 = vunpack.c.l.b16 %v210
    %v243 = vunpack.c.l.b16 %v211
    %v244 = vunpack.c.l.b16 %v212
    %v245 = vunpack.c.l.b16 %v213
    %v246 = vunpack.c.l.b16 %v214
    %v247 = vunpack.c.l.b16 %v215
    %v248 = vunpack.c.l.b16 %v216
    %vm249 = vcmask 1041409
    %v250 = vsel %vm249, %v242, %v241
    %vm251 = vcmask 1042434
    %v252 = vsel %vm251, %v243, %v250
    %vm253 = vcmask 1043459
    %v254 = vsel %vm253, %v244, %v252
    %vm255 = vcmask 1044484
    %v256 = vsel %vm255, %v245, %v254
    %vm257 = vcmask 1045509
    %v258 = vsel %vm257, %v246, %v256
    %vm259 = vcmask 1046534
    %v260 = vsel %vm259, %v247, %v258
    %vm261 = vcmask 1047559
    %v262 = vsel %vm261, %v248, %v260
    %v263 = vpack.c.b16 %v262, %v262
    %v281 = vunpack.c.l.b16 %v217
    %v282 = vunpack.c.l.b16 %v218
    %v283 = vunpack.c.l.b16 %v219
    %v284 = vunpack.c.l.b16 %v220
    %v285 = vunpack.c.l.b16 %v221
    %v286 = vunpack.c.l.b16 %v222
    %v287 = vunpack.c.l.b16 %v223
    %v288 = vunpack.c.l.b16 %v224
    %v289 = vunpack.c.l.b16 %v225
    %v290 = vunpack.c.l.b16 %v226
    %v291 = vunpack.c.l.b16 %v227
    %v292 = vunpack.c.l.b16 %v228
    %v293 = vunpack.c.l.b16 %v229
    %v294 = vunpack.c.l.b16 %v230
    %v295 = vunpack.c.l.b16 %v231
    %v296 = vunpack.c.l.b16 %v232
    %v297 = vpack.c.b16 %v282, %v281
    %v298 = vpack.c.b16 %v284, %v283
    %v299 = vpack.c.b16 %v286, %v285
    %v300 = vpack.c.b16 %v288, %v287
    %v301 = vpack.c.b16 %v290, %v289
    %v302 = vpack.c.b16 %v292, %v291
    %v303 = vpack.c.b16 %v294, %v293
    %v304 = vpack.c.b16 %v296, %v295
    %313 = vmatprep.subr.bf16.mxu0 0
    %314 = vmatpush1.bf16.msra.mxu0 %v297
    %315 = vmatprep.subr.bf16.mxu0 0
    %316 = vmatpush1.bf16.msra.mxu0 %v298
    %317 = vmatprep.subr.bf16.mxu0 0
    %318 = vmatpush1.bf16.msra.mxu0 %v299
    %319 = vmatprep.subr.bf16.mxu0 0
    %320 = vmatpush1.bf16.msra.mxu0 %v300
    %321 = vmatprep.subr.bf16.mxu0 0
    %322 = vmatpush1.bf16.msra.mxu0 %v301
    %323 = vmatprep.subr.bf16.mxu0 0
    %324 = vmatpush1.bf16.msra.mxu0 %v302
    %325 = vmatprep.subr.bf16.mxu0 0
    %326 = vmatpush1.bf16.msra.mxu0 %v303
    %327 = vmatprep.subr.bf16.mxu0 0
    %328 = vmatpush1.bf16.msra.mxu0 %v304
    %329 = vmatprep.subr.bf16.mxu0 0
    %330 = vmatpush1.bf16.msra.mxu0 0
    %331 = vmatprep.subr.bf16.mxu0 0
    %332 = vmatpush1.bf16.msra.mxu0 0
    %333 = vmatprep.subr.bf16.mxu0 0
    %334 = vmatpush1.bf16.msra.mxu0 0
    %335 = vmatprep.subr.bf16.mxu0 0
    %336 = vmatpush1.bf16.msra.mxu0 0
    %337 = vmatprep.subr.bf16.mxu0 0
    %338 = vmatpush1.bf16.msra.mxu0 0
    %339 = vmatprep.subr.bf16.mxu0 0
    %340 = vmatpush1.bf16.msra.mxu0 0
    %341 = vmatprep.subr.bf16.mxu0 0
    %342 = vmatpush1.bf16.msra.mxu0 0
    %343 = vmatprep.subr.bf16.mxu0 0
    %344 = vmatpush1.bf16.msra.mxu0 0
    %345 = vmatprep.mubr.bf16.mxu0 0
    %346 = vmatmul.mubr.bf16.gmra.mrb[0].mxu0 %v263
    %v347 = vpop.f32.mrb[0].mxu0
    %v348 = vadd.f32 0.0, %v347
    %v349 = vpop.f32.mrb[0].mxu0
    %v350 = vpop.f32.mrb[0].mxu0
    %v351 = vpop.f32.mrb[0].mxu0
    %352 = vdwg.mxu0
    %v353 = vpack.c.bf16 %v348, %v348
    %v354 = vld [vmem:[#allocation7] sm:$0xf]
    %v355 = vld [vmem:[#allocation7 + $0x4] sm:$0xf]
    %v356 = vld [vmem:[#allocation7 + $0x8] sm:$0xf]
    %v357 = vld [vmem:[#allocation7 + $0xc] sm:$0xf]
    %v358 = vld [vmem:[#allocation7 + $0x10] sm:$0xf]
    %v359 = vld [vmem:[#allocation7 + $0x14] sm:$0xf]
    %v360 = vld [vmem:[#allocation7 + $0x18] sm:$0xf]
    %v361 = vld [vmem:[#allocation7 + $0x1c] sm:$0xf]
    %v362 = vld [vmem:[#allocation7 + $0x20] sm:$0xf]
    %v363 = vld [vmem:[#allocation7 + $0x24] sm:$0xf]
    %v364 = vld [vmem:[#allocation7 + $0x28] sm:$0xf]
    %v365 = vld [vmem:[#allocation7 + $0x2c] sm:$0xf]
    %v366 = vld [vmem:[#allocation7 + $0x30] sm:$0xf]
    %v367 = vld [vmem:[#allocation7 + $0x34] sm:$0xf]
    %v368 = vld [vmem:[#allocation7 + $0x38] sm:$0xf]
    %v369 = vld [vmem:[#allocation7 + $0x3c] sm:$0xf]
    %v370 = vld [vmem:[%s3] sm:$0x1]
    %v372 = vlaneseq
    %v373 = vshrl.u32 %v372, 7
    %v374 = vsub.s32 0, %v373
    %v375 = vrot.slane %v370, %v374
    %v393 = vunpack.c.l.b16 %v354
    %v394 = vunpack.c.l.b16 %v355
    %v395 = vunpack.c.l.b16 %v356
    %v396 = vunpack.c.l.b16 %v357
    %v397 = vunpack.c.l.b16 %v358
    %v398 = vunpack.c.l.b16 %v359
    %v399 = vunpack.c.l.b16 %v360
    %v400 = vunpack.c.l.b16 %v361
    %v401 = vunpack.c.l.b16 %v362
    %v402 = vunpack.c.l.b16 %v363
    %v403 = vunpack.c.l.b16 %v364
    %v404 = vunpack.c.l.b16 %v365
    %v405 = vunpack.c.l.b16 %v366
    %v406 = vunpack.c.l.b16 %v367
    %v407 = vunpack.c.l.b16 %v368
    %v408 = vunpack.c.l.b16 %v369
    %v409 = vpack.c.b16 %v394, %v393
    %v410 = vpack.c.b16 %v396, %v395
    %v411 = vpack.c.b16 %v398, %v397
    %v412 = vpack.c.b16 %v400, %v399
    %v413 = vpack.c.b16 %v402, %v401
    %v414 = vpack.c.b16 %v404, %v403
    %v415 = vpack.c.b16 %v406, %v405
    %v416 = vpack.c.b16 %v408, %v407
    %425 = vmatprep.subr.bf16.mxu0 0
    %426 = vmatpush1.bf16.msra.mxu0 %v409
    %427 = vmatprep.subr.bf16.mxu0 0
    %428 = vmatpush1.bf16.msra.mxu0 %v410
    %429 = vmatprep.subr.bf16.mxu0 0
    %430 = vmatpush1.bf16.msra.mxu0 %v411
    %431 = vmatprep.subr.bf16.mxu0 0
    %432 = vmatpush1.bf16.msra.mxu0 %v412
    %433 = vmatprep.subr.bf16.mxu0 0
    %434 = vmatpush1.bf16.msra.mxu0 %v413
    %435 = vmatprep.subr.bf16.mxu0 0
    %436 = vmatpush1.bf16.msra.mxu0 %v414
    %437 = vmatprep.subr.bf16.mxu0 0
    %438 = vmatpush1.bf16.msra.mxu0 %v415
    %439 = vmatprep.subr.bf16.mxu0 0
    %440 = vmatpush1.bf16.msra.mxu0 %v416
    %441 = vmatprep.subr.bf16.mxu0 0
    %442 = vmatpush1.bf16.msra.mxu0 0
    %443 = vmatprep.subr.bf16.mxu0 0
    %444 = vmatpush1.bf16.msra.mxu0 0
    %445 = vmatprep.subr.bf16.mxu0 0
    %446 = vmatpush1.bf16.msra.mxu0 0
    %447 = vmatprep.subr.bf16.mxu0 0
    %448 = vmatpush1.bf16.msra.mxu0 0
    %449 = vmatprep.subr.bf16.mxu0 0
    %450 = vmatpush1.bf16.msra.mxu0 0
    %451 = vmatprep.subr.bf16.mxu0 0
    %452 = vmatpush1.bf16.msra.mxu0 0
    %453 = vmatprep.subr.bf16.mxu0 0
    %454 = vmatpush1.bf16.msra.mxu0 0
    %455 = vmatprep.subr.bf16.mxu0 0
    %456 = vmatpush1.bf16.msra.mxu0 0
    %457 = vmatprep.mubr.bf16.mxu0 0
    %458 = vmatmul.mubr.bf16.gmra.mrb[0].mxu0 %v353
    %v459 = vpop.f32.mrb[0].mxu0
    %v460 = vadd.f32 %v375, %v459
    %v461 = vpop.f32.mrb[0].mxu0
    %v462 = vpop.f32.mrb[0].mxu0
    %v463 = vpop.f32.mrb[0].mxu0
    %464 = vdwg.mxu0
    %v465 = vmax.f32 %v460, 0.0
    %v466 = vpack.c.bf16 %v465, %v465
    %v467 = vld [vmem:[#allocation8] sm:$0xf]
    %v468 = vld [vmem:[#allocation8 + $0x4] sm:$0xf]
    %v469 = vld [vmem:[#allocation8 + $0x8] sm:$0xf]
    %v470 = vld [vmem:[#allocation8 + $0xc] sm:$0xf]
    %v471 = vld [vmem:[#allocation8 + $0x10] sm:$0xf]
    %v472 = vld [vmem:[#allocation8 + $0x14] sm:$0xf]
    %v473 = vld [vmem:[#allocation8 + $0x18] sm:$0xf]
    %v474 = vld [vmem:[#allocation8 + $0x1c] sm:$0xf]
    %v475 = vld [vmem:[#allocation8 + $0x20] sm:$0xf]
    %v476 = vld [vmem:[#allocation8 + $0x24] sm:$0xf]
    %v477 = vld [vmem:[#allocation8 + $0x28] sm:$0xf]
    %v478 = vld [vmem:[#allocation8 + $0x2c] sm:$0xf]
    %v479 = vld [vmem:[#allocation8 + $0x30] sm:$0xf]
    %v480 = vld [vmem:[#allocation8 + $0x34] sm:$0xf]
    %v481 = vld [vmem:[#allocation8 + $0x38] sm:$0xf]
    %v482 = vld [vmem:[#allocation8 + $0x3c] sm:$0xf]
    %v483 = vld [vmem:[%s5] sm:$0x1]
    %v485 = vlaneseq
    %v486 = vshrl.u32 %v485, 7
    %v487 = vsub.s32 0, %v486
    %v488 = vrot.slane %v483, %v487
    %v506 = vunpack.c.l.b16 %v467
    %v507 = vunpack.c.l.b16 %v468
    %v508 = vunpack.c.l.b16 %v469
    %v509 = vunpack.c.l.b16 %v470
    %v510 = vunpack.c.l.b16 %v471
    %v511 = vunpack.c.l.b16 %v472
    %v512 = vunpack.c.l.b16 %v473
    %v513 = vunpack.c.l.b16 %v474
    %v514 = vunpack.c.l.b16 %v475
    %v515 = vunpack.c.l.b16 %v476
    %v516 = vunpack.c.l.b16 %v477
    %v517 = vunpack.c.l.b16 %v478
    %v518 = vunpack.c.l.b16 %v479
    %v519 = vunpack.c.l.b16 %v480
    %v520 = vunpack.c.l.b16 %v481
    %v521 = vunpack.c.l.b16 %v482
    %v522 = vpack.c.b16 %v507, %v506
    %v523 = vpack.c.b16 %v509, %v508
    %v524 = vpack.c.b16 %v511, %v510
    %v525 = vpack.c.b16 %v513, %v512
    %v526 = vpack.c.b16 %v515, %v514
    %v527 = vpack.c.b16 %v517, %v516
    %v528 = vpack.c.b16 %v519, %v518
    %v529 = vpack.c.b16 %v521, %v520
    %538 = vmatprep.subr.bf16.mxu0 0
    %539 = vmatpush1.bf16.msra.mxu0 %v522
    %540 = vmatprep.subr.bf16.mxu0 0
    %541 = vmatpush1.bf16.msra.mxu0 %v523
    %542 = vmatprep.subr.bf16.mxu0 0
    %543 = vmatpush1.bf16.msra.mxu0 %v524
    %544 = vmatprep.subr.bf16.mxu0 0
    %545 = vmatpush1.bf16.msra.mxu0 %v525
    %546 = vmatprep.subr.bf16.mxu0 0
    %547 = vmatpush1.bf16.msra.mxu0 %v526
    %548 = vmatprep.subr.bf16.mxu0 0
    %549 = vmatpush1.bf16.msra.mxu0 %v527
    %550 = vmatprep.subr.bf16.mxu0 0
    %551 = vmatpush1.bf16.msra.mxu0 %v528
    %552 = vmatprep.subr.bf16.mxu0 0
    %553 = vmatpush1.bf16.msra.mxu0 %v529
    %554 = vmatprep.subr.bf16.mxu0 0
    %555 = vmatpush1.bf16.msra.mxu0 0
    %556 = vmatprep.subr.bf16.mxu0 0
    %557 = vmatpush1.bf16.msra.mxu0 0
    %558 = vmatprep.subr.bf16.mxu0 0
    %559 = vmatpush1.bf16.msra.mxu0 0
    %560 = vmatprep.subr.bf16.mxu0 0
    %561 = vmatpush1.bf16.msra.mxu0 0
    %562 = vmatprep.subr.bf16.mxu0 0
    %563 = vmatpush1.bf16.msra.mxu0 0
    %564 = vmatprep.subr.bf16.mxu0 0
    %565 = vmatpush1.bf16.msra.mxu0 0
    %566 = vmatprep.subr.bf16.mxu0 0
    %567 = vmatpush1.bf16.msra.mxu0 0
    %568 = vmatprep.subr.bf16.mxu0 0
    %569 = vmatpush1.bf16.msra.mxu0 0
    %570 = vmatprep.mubr.bf16.mxu0 0
    %571 = vmatmul.mubr.bf16.gmra.mrb[0].mxu0 %v466
    %v572 = vpop.f32.mrb[0].mxu0
    %v573 = vadd.f32 %v488, %v572
    %v574 = vpop.f32.mrb[0].mxu0
    %v575 = vpop.f32.mrb[0].mxu0
    %v576 = vpop.f32.mrb[0].mxu0
    %577 = vdwg.mxu0
    %578 = vmax.xlane.f32.xlu0 %v573
    %v579 = vpop.xlane.xlu0 %578
    %v580 = vsub.f32 %v573, %v579
    %v581 = vmul.f32 %v580, 1.442695
    %v582 = vpow.pop %v581
    %583 = vadd.xlane.f32.xlu0 %v582
    %v584 = vpop.xlane.xlu0 %583
    %v585 = vlog2.pop %v584
    %v586 = vmul.f32 %v585, 0.6931472
    %v587 = vsub.f32 %v580, %v586
    %588 = vst [vmem:[#allocation10] sm:$0xff] %v587
    // Predicated region
    $region42: #{tpu_custom_call.1} parent=1 // pred_check
      _
    $region43: #{tpu_custom_call.1} parent=1 // pred_check_branch
      %590 = sbr.rel (0) target = $region45
    $region44: #{tpu_custom_call.1} parent=1 // pred_region
      %s592 = ssub.s32 128, 128
      %593 = vsyncadd [#allocation4], %s592
      %s595 = sshll.u32 [#allocation10], 4
      %s596 = int_to_ptr.vmem [resolvable:$true] %s595
      %598 = dma.vmem_to_hbm [thread:$0]  %s596, 128, %s6, [#allocation4]
    $region45: #{tpu_custom_call.1} parent=1 // pred_fallthru
      _
    // Predicated region
    $region46: #{tpu_custom_call.1} parent=1 // pred_check
      _
    $region47: #{tpu_custom_call.1} parent=1 // pred_check_branch
      %600 = sbr.rel (0) target = $region49
    $region48: #{tpu_custom_call.1} parent=1 // pred_region
      %601 = dma.done [#allocation4], 128
    $region49: #{tpu_custom_call.1} parent=1 // pred_fallthru
      _
    %602 = vsyncpa [#allocation3], 1
    %603 = vsyncpa [#allocation6], 1
    %604 = vsyncpa [#allocation9], 1
    %605 = vsyncpa [#allocation4], 1

</llo_original>
